<compile_context>
chip_gen: v5e
topology: v5e:2x2
jax: 0.10.0
libtpu: 0.0.40
codegen_flags: <defaults>
</compile_context>

<pallas_src>
import functools

import jax
import jax.numpy as jnp
from jax.experimental import pallas as pl
from jax.experimental.pallas import tpu as pltpu


def double_conv_kernel(x_ref, w1_ref, b1_ref, w2_ref, b2_ref, masks_ref,
                       out_ref, xs_ref, hs_ref, *, width, npix, cin, cmid):
    """One batch element: (conv3x3 + folded BN + ReLU) x 2, channels on sublanes.

    x_ref:     (Cin, P)  f32   flat unpadded pixels (P = H*W on lanes)
    w1_ref:    (Cmid, 9*Cin)  bf16   BN1 folded, tap-major K
    w2_ref:    (Cout, 9*Cmid) bf16   BN2 folded, tap-major K
    b1/b2:     (Cmid,1)/(Cout,1) f32
    masks_ref: (9, P) f32  per-tap validity (implements the conv zero padding)
    xs_ref:    (9*Cin, P)  f32 scratch — K-stacked conv1 operand
    hs_ref:    (9*Cmid, P) f32 scratch — K-stacked conv2 operand
    """

    def build_stack(src, stack_ref, c):
        # stack_ref[t*c:(t+1)*c, p] = mask_t[p] * src[:, p + dy*width + dx]
        for t in range(9):
            dy, dx = t // 3 - 1, t % 3 - 1
            d = dy * width + dx
            if d == 0:
                shifted = src                     # center tap: no shift, no mask
            else:
                # result[p] = src[(p + d) mod P]; out-of-image sources are zeroed
                # by the tap mask, so the wraparound never reaches a kept output.
                shifted = pltpu.roll(src, shift=(-d) % npix, axis=1)
                shifted = shifted * masks_ref[pl.ds(t, 1), :]
            stack_ref[pl.ds(t * c, c), :] = shifted

    # ---- conv1 (+ folded BN1) + ReLU: one K=9*Cin bf16 MXU matmul ----
    build_stack(x_ref[...], xs_ref, cin)
    h = jnp.dot(w1_ref[...], xs_ref[...].astype(jnp.bfloat16),
                preferred_element_type=jnp.float32)          # (Cmid, P) f32
    h = jnp.maximum(h + b1_ref[...], 0.0)

    # ---- conv2 (+ folded BN2) + ReLU: one K=9*Cmid bf16 MXU matmul ----
    build_stack(h, hs_ref, cmid)
    o = jnp.dot(w2_ref[...], hs_ref[...].astype(jnp.bfloat16),
                preferred_element_type=jnp.float32)          # (Cout, P) f32
    out_ref[...] = jnp.maximum(o + b2_ref[...], 0.0).astype(out_ref.dtype)


def _fold_bn(w, gamma, beta, mean, var, eps=1e-5):
    """Fold eval-mode BatchNorm into a (Cout, Cin, 3, 3) conv weight + bias."""
    scale = gamma / jnp.sqrt(var + eps)                      # (Cout,)
    return w * scale[:, None, None, None], beta - mean * scale


def _stack_taps(w):
    """(Cout, Cin, 3, 3) -> (Cout, 9*Cin); K index = (3*ky + kx)*Cin + cin."""
    co, ci, _, _ = w.shape
    return jnp.transpose(w, (0, 2, 3, 1)).reshape(co, 9 * ci)


@jax.jit
def double_conv(x, params):
    """x: (N, Cin, H, W) -> (N, Cout, H, W). Matches DoubleConv.forward (eval BN)."""
    N, Cin, H, W = x.shape
    P = H * W  # flat pixel axis on lanes (H*W a multiple of 128 for typical maps)

    w1, b1 = _fold_bn(params["w1"], params["bn1_g"], params["bn1_b"],
                      params["bn1_m"], params["bn1_v"])
    w2, b2 = _fold_bn(params["w2"], params["bn2_g"], params["bn2_b"],
                      params["bn2_m"], params["bn2_v"])
    Cmid, Cout = w1.shape[0], w2.shape[0]

    w1s = _stack_taps(w1).astype(jnp.bfloat16)               # (Cmid, 9*Cin)
    w2s = _stack_taps(w2).astype(jnp.bfloat16)               # (Cout, 9*Cmid)
    b1 = b1.reshape(Cmid, 1).astype(jnp.float32)
    b2 = b2.reshape(Cout, 1).astype(jnp.float32)

    # Per-tap validity masks over the flat (unpadded) pixel grid.  These implement
    # the conv zero padding, so no padded image is ever materialized.
    q = jnp.arange(P, dtype=jnp.int32)
    r, c = q // W, q % W
    masks = jnp.stack(
        [((r + (t // 3 - 1) >= 0) & (r + (t // 3 - 1) < H) &
          (c + (t % 3 - 1) >= 0) & (c + (t % 3 - 1) < W)) for t in range(9)]
    ).astype(jnp.float32)                                    # (9, P)

    xf = x.reshape(N, Cin, P)                                # free reshape, no pad

    kernel = functools.partial(double_conv_kernel,
                               width=W, npix=P, cin=Cin, cmid=Cmid)

    flops = 2 * N * P * 9 * (Cmid * Cin + Cout * Cmid)
    bytes_accessed = ((N * Cin * P + N * Cout * P) * 4
                      + (Cmid * 9 * Cin + Cout * 9 * Cmid) * 2
                      + (Cmid + Cout) * 4 + 9 * P * 4)

    out_flat = pl.pallas_call(
        kernel,
        out_shape=jax.ShapeDtypeStruct((N, Cout, P), x.dtype),
        grid_spec=pltpu.PrefetchScalarGridSpec(
            num_scalar_prefetch=0,
            grid=(N,),
            in_specs=[
                pl.BlockSpec((None, Cin, P), lambda n: (n, 0, 0)),   # x (flat)
                pl.BlockSpec((Cmid, 9 * Cin), lambda n: (0, 0)),     # conv1 taps (BN folded)
                pl.BlockSpec((Cmid, 1), lambda n: (0, 0)),           # bias1
                pl.BlockSpec((Cout, 9 * Cmid), lambda n: (0, 0)),    # conv2 taps (BN folded)
                pl.BlockSpec((Cout, 1), lambda n: (0, 0)),           # bias2
                pl.BlockSpec((9, P), lambda n: (0, 0)),              # per-tap masks
            ],
            out_specs=pl.BlockSpec((None, Cout, P), lambda n: (n, 0, 0)),
            scratch_shapes=[
                pltpu.VMEM((9 * Cin, P), jnp.float32),               # conv1 K-stack
                pltpu.VMEM((9 * Cmid, P), jnp.float32),              # conv2 K-stack
            ],
        ),
        compiler_params=pltpu.CompilerParams(
            dimension_semantics=("parallel",)),
        cost_estimate=pl.CostEstimate(flops=flops, transcendentals=0,
                                      bytes_accessed=bytes_accessed),
    )(xf, w1s, b1, w2s, b2, masks)

    # Free reshape (no crop, no copy): the kernel already wrote the unpadded layout.
    return out_flat.reshape(N, Cout, H, W)


# ----------------------------- reference & test -----------------------------

def _bn_ref(y, gamma, beta, mean, var, eps=1e-5):
    inv = gamma / jnp.sqrt(var + eps)
    return (y - mean[None, :, None, None]) * inv[None, :, None, None] \
        + beta[None, :, None, None]


def _conv3x3_ref(x, w):
    return jax.lax.conv_general_dilated(
        x, w, window_strides=(1, 1), padding=((1, 1), (1, 1)),
        dimension_numbers=("NCHW", "OIHW", "NCHW"),
        precision=jax.lax.Precision.HIGHEST)


def double_conv_ref(x, p):
    h = jnp.maximum(_bn_ref(_conv3x3_ref(x, p["w1"]), p["bn1_g"], p["bn1_b"],
                            p["bn1_m"], p["bn1_v"]), 0.0)
    y = jnp.maximum(_bn_ref(_conv3x3_ref(h, p["w2"]), p["bn2_g"], p["bn2_b"],
                            p["bn2_m"], p["bn2_v"]), 0.0)
    return y


def make_params(key, in_channels, mid_channels, out_channels):
    ks = jax.random.split(key, 2)
    w1 = 0.2 * jax.random.normal(ks[0], (mid_channels, in_channels, 3, 3), jnp.float32)
    w2 = 0.2 * jax.random.normal(ks[1], (out_channels, mid_channels, 3, 3), jnp.float32)
    am = jnp.arange(mid_channels, dtype=jnp.float32)
    ao = jnp.arange(out_channels, dtype=jnp.float32)
    return dict(
        w1=w1, w2=w2,
        bn1_g=1.0 + 0.1 * jnp.cos(am), bn1_b=0.05 * am,
        bn1_m=0.02 * am - 0.1, bn1_v=1.0 + 0.3 * (am % 3),
        bn2_g=1.0 - 0.05 * ao / out_channels, bn2_b=jnp.full((out_channels,), -0.03),
        bn2_m=0.01 * ao, bn2_v=1.0 + 0.1 * (ao % 2),
    )


if __name__ == "__main__":
    N, Cin, Cout, H, W = 2, 4, 8, 16, 16
    Cmid = Cout  # mid_channels defaults to out_channels in the PyTorch module

    key = jax.random.PRNGKey(0)
    kx, kp = jax.random.split(key)
    x = jax.random.normal(kx, (N, Cin, H, W), jnp.float32)
    params = make_params(kp, Cin, Cmid, Cout)

    out = jax.block_until_ready(double_conv(x, params))

    ref = double_conv_ref(x, params)
    assert out.shape == (N, Cout, H, W)
    err = float(jnp.max(jnp.abs(out - ref)))
    # bf16 MXU operands with f32 accumulation -> tolerance relaxed accordingly.
    assert jnp.allclose(out, ref, atol=5e-2, rtol=5e-2), f"max abs err={err}"
    print("KERNEL_OK")
</pallas_src>

<mosaic_0001>
module attributes {stable_mosaic.version = 11 : i64} {
  func.func @double_conv_kernel(%arg0: i32, %arg1: memref<1x4x256xf32, #tpu.memory_space<vmem>>, %arg2: memref<8x36xbf16, #tpu.memory_space<vmem>>, %arg3: memref<8x1xf32, #tpu.memory_space<vmem>>, %arg4: memref<8x72xbf16, #tpu.memory_space<vmem>>, %arg5: memref<8x1xf32, #tpu.memory_space<vmem>>, %arg6: memref<9x256xf32, #tpu.memory_space<vmem>>, %arg7: memref<1x8x256xf32, #tpu.memory_space<vmem>>, %arg8: memref<36x256xf32, #tpu.memory_space<vmem>>, %arg9: memref<72x256xf32, #tpu.memory_space<vmem>>) attributes {dimension_semantics = [#tpu.dimension_semantics<parallel>], iteration_bounds = array<i64: 2>, scalar_prefetch = 0 : i64, scratch_operands = 2 : i64, tpu.core_type = #tpu.core_type<tc>, window_params = [{transform_indices = @transform_0, window_bounds = array<i64: 1, 4, 256>}, {pipeline_mode = #tpu.pipeline_mode<synchronous>, transform_indices = @transform_1, window_bounds = array<i64: 8, 36>}, {pipeline_mode = #tpu.pipeline_mode<synchronous>, transform_indices = @transform_2, window_bounds = array<i64: 8, 1>}, {pipeline_mode = #tpu.pipeline_mode<synchronous>, transform_indices = @transform_3, window_bounds = array<i64: 8, 72>}, {pipeline_mode = #tpu.pipeline_mode<synchronous>, transform_indices = @transform_4, window_bounds = array<i64: 8, 1>}, {pipeline_mode = #tpu.pipeline_mode<synchronous>, transform_indices = @transform_5, window_bounds = array<i64: 9, 256>}, {transform_indices = @transform_6, window_bounds = array<i64: 1, 8, 256>}]} {
    %c0 = arith.constant 0 : index
    %c0_0 = arith.constant 0 : index
    %c0_1 = arith.constant 0 : index
    %0 = vector.load %arg1[%c0, %c0_0, %c0_1] : memref<1x4x256xf32, #tpu.memory_space<vmem>>, vector<1x4x256xf32>
    %1 = vector.shape_cast %0 : vector<1x4x256xf32> to vector<4x256xf32>
    %c17_i32 = arith.constant 17 : i32
    %2 = tpu.dynamic_rotate %1 by %c17_i32 dim 1 : vector<4x256xf32>, i32 -> vector<4x256xf32>
    %c0_2 = arith.constant 0 : index
    %c0_3 = arith.constant 0 : index
    %3 = vector.load %arg6[%c0_2, %c0_3] : memref<9x256xf32, #tpu.memory_space<vmem>>, vector<1x256xf32>
    %4 = vector.broadcast %3 : vector<1x256xf32> to vector<4x256xf32>
    %5 = arith.mulf %2, %4 : vector<4x256xf32>
    %c0_4 = arith.constant 0 : index
    %c0_5 = arith.constant 0 : index
    %6 = vector.load %arg8[%c0_4, %c0_5] : memref<36x256xf32, #tpu.memory_space<vmem>>, vector<4x256xf32>
    tpu.vector_store %arg8[%c0_4, %c0_5], %5 {strides = array<i32>} : memref<36x256xf32, #tpu.memory_space<vmem>>, vector<4x256xf32>,
    %c16_i32 = arith.constant 16 : i32
    %7 = tpu.dynamic_rotate %1 by %c16_i32 dim 1 : vector<4x256xf32>, i32 -> vector<4x256xf32>
    %c1 = arith.constant 1 : index
    %c0_6 = arith.constant 0 : index
    %8 = vector.load %arg6[%c1, %c0_6] : memref<9x256xf32, #tpu.memory_space<vmem>>, vector<1x256xf32>
    %9 = vector.broadcast %8 : vector<1x256xf32> to vector<4x256xf32>
    %10 = arith.mulf %7, %9 : vector<4x256xf32>
    %c4 = arith.constant 4 : index
    %c0_7 = arith.constant 0 : index
    %11 = vector.load %arg8[%c4, %c0_7] : memref<36x256xf32, #tpu.memory_space<vmem>>, vector<4x256xf32>
    tpu.vector_store %arg8[%c4, %c0_7], %10 {strides = array<i32>} : memref<36x256xf32, #tpu.memory_space<vmem>>, vector<4x256xf32>,
    %c15_i32 = arith.constant 15 : i32
    %12 = tpu.dynamic_rotate %1 by %c15_i32 dim 1 : vector<4x256xf32>, i32 -> vector<4x256xf32>
    %c2 = arith.constant 2 : index
    %c0_8 = arith.constant 0 : index
    %13 = vector.load %arg6[%c2, %c0_8] : memref<9x256xf32, #tpu.memory_space<vmem>>, vector<1x256xf32>
    %14 = vector.broadcast %13 : vector<1x256xf32> to vector<4x256xf32>
    %15 = arith.mulf %12, %14 : vector<4x256xf32>
    %c8 = arith.constant 8 : index
    %c0_9 = arith.constant 0 : index
    %16 = vector.load %arg8[%c8, %c0_9] : memref<36x256xf32, #tpu.memory_space<vmem>>, vector<4x256xf32>
    tpu.vector_store %arg8[%c8, %c0_9], %15 {strides = array<i32>} : memref<36x256xf32, #tpu.memory_space<vmem>>, vector<4x256xf32>,
    %c1_i32 = arith.constant 1 : i32
    %17 = tpu.dynamic_rotate %1 by %c1_i32 dim 1 : vector<4x256xf32>, i32 -> vector<4x256xf32>
    %c3 = arith.constant 3 : index
    %c0_10 = arith.constant 0 : index
    %18 = vector.load %arg6[%c3, %c0_10] : memref<9x256xf32, #tpu.memory_space<vmem>>, vector<1x256xf32>
    %19 = vector.broadcast %18 : vector<1x256xf32> to vector<4x256xf32>
    %20 = arith.mulf %17, %19 : vector<4x256xf32>
    %c12 = arith.constant 12 : index
    %c0_11 = arith.constant 0 : index
    %21 = vector.load %arg8[%c12, %c0_11] : memref<36x256xf32, #tpu.memory_space<vmem>>, vector<4x256xf32>
    tpu.vector_store %arg8[%c12, %c0_11], %20 {strides = array<i32>} : memref<36x256xf32, #tpu.memory_space<vmem>>, vector<4x256xf32>,
    %c16 = arith.constant 16 : index
    %c0_12 = arith.constant 0 : index
    %22 = vector.load %arg8[%c16, %c0_12] : memref<36x256xf32, #tpu.memory_space<vmem>>, vector<4x256xf32>
    tpu.vector_store %arg8[%c16, %c0_12], %1 {strides = array<i32>} : memref<36x256xf32, #tpu.memory_space<vmem>>, vector<4x256xf32>,
    %c255_i32 = arith.constant 255 : i32
    %23 = tpu.dynamic_rotate %1 by %c255_i32 dim 1 : vector<4x256xf32>, i32 -> vector<4x256xf32>
    %c5 = arith.constant 5 : index
    %c0_13 = arith.constant 0 : index
    %24 = vector.load %arg6[%c5, %c0_13] : memref<9x256xf32, #tpu.memory_space<vmem>>, vector<1x256xf32>
    %25 = vector.broadcast %24 : vector<1x256xf32> to vector<4x256xf32>
    %26 = arith.mulf %23, %25 : vector<4x256xf32>
    %c20 = arith.constant 20 : index
    %c0_14 = arith.constant 0 : index
    %27 = vector.load %arg8[%c20, %c0_14] : memref<36x256xf32, #tpu.memory_space<vmem>>, vector<4x256xf32>
    tpu.vector_store %arg8[%c20, %c0_14], %26 {strides = array<i32>} : memref<36x256xf32, #tpu.memory_space<vmem>>, vector<4x256xf32>,
    %c241_i32 = arith.constant 241 : i32
    %28 = tpu.dynamic_rotate %1 by %c241_i32 dim 1 : vector<4x256xf32>, i32 -> vector<4x256xf32>
    %c6 = arith.constant 6 : index
    %c0_15 = arith.constant 0 : index
    %29 = vector.load %arg6[%c6, %c0_15] : memref<9x256xf32, #tpu.memory_space<vmem>>, vector<1x256xf32>
    %30 = vector.broadcast %29 : vector<1x256xf32> to vector<4x256xf32>
    %31 = arith.mulf %28, %30 : vector<4x256xf32>
    %c24 = arith.constant 24 : index
    %c0_16 = arith.constant 0 : index
    %32 = vector.load %arg8[%c24, %c0_16] : memref<36x256xf32, #tpu.memory_space<vmem>>, vector<4x256xf32>
    tpu.vector_store %arg8[%c24, %c0_16], %31 {strides = array<i32>} : memref<36x256xf32, #tpu.memory_space<vmem>>, vector<4x256xf32>,
    %c240_i32 = arith.constant 240 : i32
    %33 = tpu.dynamic_rotate %1 by %c240_i32 dim 1 : vector<4x256xf32>, i32 -> vector<4x256xf32>
    %c7 = arith.constant 7 : index
    %c0_17 = arith.constant 0 : index
    %34 = vector.load %arg6[%c7, %c0_17] : memref<9x256xf32, #tpu.memory_space<vmem>>, vector<1x256xf32>
    %35 = vector.broadcast %34 : vector<1x256xf32> to vector<4x256xf32>
    %36 = arith.mulf %33, %35 : vector<4x256xf32>
    %c28 = arith.constant 28 : index
    %c0_18 = arith.constant 0 : index
    %37 = vector.load %arg8[%c28, %c0_18] : memref<36x256xf32, #tpu.memory_space<vmem>>, vector<4x256xf32>
    tpu.vector_store %arg8[%c28, %c0_18], %36 {strides = array<i32>} : memref<36x256xf32, #tpu.memory_space<vmem>>, vector<4x256xf32>,
    %c239_i32 = arith.constant 239 : i32
    %38 = tpu.dynamic_rotate %1 by %c239_i32 dim 1 : vector<4x256xf32>, i32 -> vector<4x256xf32>
    %c8_19 = arith.constant 8 : index
    %c0_20 = arith.constant 0 : index
    %39 = vector.load %arg6[%c8_19, %c0_20] : memref<9x256xf32, #tpu.memory_space<vmem>>, vector<1x256xf32>
    %40 = vector.broadcast %39 : vector<1x256xf32> to vector<4x256xf32>
    %41 = arith.mulf %38, %40 : vector<4x256xf32>
    %c32 = arith.constant 32 : index
    %c0_21 = arith.constant 0 : index
    %42 = vector.load %arg8[%c32, %c0_21] : memref<36x256xf32, #tpu.memory_space<vmem>>, vector<4x256xf32>
    tpu.vector_store %arg8[%c32, %c0_21], %41 {strides = array<i32>} : memref<36x256xf32, #tpu.memory_space<vmem>>, vector<4x256xf32>,
    %c0_22 = arith.constant 0 : index
    %c0_23 = arith.constant 0 : index
    %43 = vector.load %arg2[%c0_22, %c0_23] : memref<8x36xbf16, #tpu.memory_space<vmem>>, vector<8x36xbf16>
    %c0_24 = arith.constant 0 : index
    %c0_25 = arith.constant 0 : index
    %44 = vector.load %arg8[%c0_24, %c0_25] : memref<36x256xf32, #tpu.memory_space<vmem>>, vector<36x256xf32>
    %45 = arith.truncf %44 : vector<36x256xf32> to vector<36x256xbf16>
    %cst = arith.constant dense<0.000000e+00> : vector<8x256xf32>
    %46 = tpu.matmul %43, %45, %cst {dimension_numbers = #tpu.dot_dimension_numbers<[1], [0], [0], [1], [0, 0, 1, 1], [], []>} : vector<8x36xbf16>, vector<36x256xbf16>, vector<8x256xf32> -> vector<8x256xf32>
    %c0_26 = arith.constant 0 : index
    %c0_27 = arith.constant 0 : index
    %47 = vector.load %arg3[%c0_26, %c0_27] : memref<8x1xf32, #tpu.memory_space<vmem>>, vector<8x1xf32>
    %48 = vector.broadcast %47 : vector<8x1xf32> to vector<8x256xf32>
    %49 = arith.addf %46, %48 : vector<8x256xf32>
    %cst_28 = arith.constant 0.000000e+00 : f32
    %50 = vector.broadcast %cst_28 : f32 to vector<8x256xf32>
    %51 = arith.maximumf %49, %50 : vector<8x256xf32>
    %c17_i32_29 = arith.constant 17 : i32
    %52 = tpu.dynamic_rotate %51 by %c17_i32_29 dim 1 : vector<8x256xf32>, i32 -> vector<8x256xf32>
    %c0_30 = arith.constant 0 : index
    %c0_31 = arith.constant 0 : index
    %53 = vector.load %arg6[%c0_30, %c0_31] : memref<9x256xf32, #tpu.memory_space<vmem>>, vector<1x256xf32>
    %54 = vector.broadcast %53 : vector<1x256xf32> to vector<8x256xf32>
    %55 = arith.mulf %52, %54 : vector<8x256xf32>
    %c0_32 = arith.constant 0 : index
    %c0_33 = arith.constant 0 : index
    %56 = vector.load %arg9[%c0_32, %c0_33] : memref<72x256xf32, #tpu.memory_space<vmem>>, vector<8x256xf32>
    tpu.vector_store %arg9[%c0_32, %c0_33], %55 {strides = array<i32>} : memref<72x256xf32, #tpu.memory_space<vmem>>, vector<8x256xf32>,
    %c16_i32_34 = arith.constant 16 : i32
    %57 = tpu.dynamic_rotate %51 by %c16_i32_34 dim 1 : vector<8x256xf32>, i32 -> vector<8x256xf32>
    %c1_35 = arith.constant 1 : index
    %c0_36 = arith.constant 0 : index
    %58 = vector.load %arg6[%c1_35, %c0_36] : memref<9x256xf32, #tpu.memory_space<vmem>>, vector<1x256xf32>
    %59 = vector.broadcast %58 : vector<1x256xf32> to vector<8x256xf32>
    %60 = arith.mulf %57, %59 : vector<8x256xf32>
    %c8_37 = arith.constant 8 : index
    %c0_38 = arith.constant 0 : index
    %61 = vector.load %arg9[%c8_37, %c0_38] : memref<72x256xf32, #tpu.memory_space<vmem>>, vector<8x256xf32>
    tpu.vector_store %arg9[%c8_37, %c0_38], %60 {strides = array<i32>} : memref<72x256xf32, #tpu.memory_space<vmem>>, vector<8x256xf32>,
    %c15_i32_39 = arith.constant 15 : i32
    %62 = tpu.dynamic_rotate %51 by %c15_i32_39 dim 1 : vector<8x256xf32>, i32 -> vector<8x256xf32>
    %c2_40 = arith.constant 2 : index
    %c0_41 = arith.constant 0 : index
    %63 = vector.load %arg6[%c2_40, %c0_41] : memref<9x256xf32, #tpu.memory_space<vmem>>, vector<1x256xf32>
    %64 = vector.broadcast %63 : vector<1x256xf32> to vector<8x256xf32>
    %65 = arith.mulf %62, %64 : vector<8x256xf32>
    %c16_42 = arith.constant 16 : index
    %c0_43 = arith.constant 0 : index
    %66 = vector.load %arg9[%c16_42, %c0_43] : memref<72x256xf32, #tpu.memory_space<vmem>>, vector<8x256xf32>
    tpu.vector_store %arg9[%c16_42, %c0_43], %65 {strides = array<i32>} : memref<72x256xf32, #tpu.memory_space<vmem>>, vector<8x256xf32>,
    %c1_i32_44 = arith.constant 1 : i32
    %67 = tpu.dynamic_rotate %51 by %c1_i32_44 dim 1 : vector<8x256xf32>, i32 -> vector<8x256xf32>
    %c3_45 = arith.constant 3 : index
    %c0_46 = arith.constant 0 : index
    %68 = vector.load %arg6[%c3_45, %c0_46] : memref<9x256xf32, #tpu.memory_space<vmem>>, vector<1x256xf32>
    %69 = vector.broadcast %68 : vector<1x256xf32> to vector<8x256xf32>
    %70 = arith.mulf %67, %69 : vector<8x256xf32>
    %c24_47 = arith.constant 24 : index
    %c0_48 = arith.constant 0 : index
    %71 = vector.load %arg9[%c24_47, %c0_48] : memref<72x256xf32, #tpu.memory_space<vmem>>, vector<8x256xf32>
    tpu.vector_store %arg9[%c24_47, %c0_48], %70 {strides = array<i32>} : memref<72x256xf32, #tpu.memory_space<vmem>>, vector<8x256xf32>,
    %c32_49 = arith.constant 32 : index
    %c0_50 = arith.constant 0 : index
    %72 = vector.load %arg9[%c32_49, %c0_50] : memref<72x256xf32, #tpu.memory_space<vmem>>, vector<8x256xf32>
    tpu.vector_store %arg9[%c32_49, %c0_50], %51 {strides = array<i32>} : memref<72x256xf32, #tpu.memory_space<vmem>>, vector<8x256xf32>,
    %c255_i32_51 = arith.constant 255 : i32
    %73 = tpu.dynamic_rotate %51 by %c255_i32_51 dim 1 : vector<8x256xf32>, i32 -> vector<8x256xf32>
    %c5_52 = arith.constant 5 : index
    %c0_53 = arith.constant 0 : index
    %74 = vector.load %arg6[%c5_52, %c0_53] : memref<9x256xf32, #tpu.memory_space<vmem>>, vector<1x256xf32>
    %75 = vector.broadcast %74 : vector<1x256xf32> to vector<8x256xf32>
    %76 = arith.mulf %73, %75 : vector<8x256xf32>
    %c40 = arith.constant 40 : index
    %c0_54 = arith.constant 0 : index
    %77 = vector.load %arg9[%c40, %c0_54] : memref<72x256xf32, #tpu.memory_space<vmem>>, vector<8x256xf32>
    tpu.vector_store %arg9[%c40, %c0_54], %76 {strides = array<i32>} : memref<72x256xf32, #tpu.memory_space<vmem>>, vector<8x256xf32>,
    %c241_i32_55 = arith.constant 241 : i32
    %78 = tpu.dynamic_rotate %51 by %c241_i32_55 dim 1 : vector<8x256xf32>, i32 -> vector<8x256xf32>
    %c6_56 = arith.constant 6 : index
    %c0_57 = arith.constant 0 : index
    %79 = vector.load %arg6[%c6_56, %c0_57] : memref<9x256xf32, #tpu.memory_space<vmem>>, vector<1x256xf32>
    %80 = vector.broadcast %79 : vector<1x256xf32> to vector<8x256xf32>
    %81 = arith.mulf %78, %80 : vector<8x256xf32>
    %c48 = arith.constant 48 : index
    %c0_58 = arith.constant 0 : index
    %82 = vector.load %arg9[%c48, %c0_58] : memref<72x256xf32, #tpu.memory_space<vmem>>, vector<8x256xf32>
    tpu.vector_store %arg9[%c48, %c0_58], %81 {strides = array<i32>} : memref<72x256xf32, #tpu.memory_space<vmem>>, vector<8x256xf32>,
    %c240_i32_59 = arith.constant 240 : i32
    %83 = tpu.dynamic_rotate %51 by %c240_i32_59 dim 1 : vector<8x256xf32>, i32 -> vector<8x256xf32>
    %c7_60 = arith.constant 7 : index
    %c0_61 = arith.constant 0 : index
    %84 = vector.load %arg6[%c7_60, %c0_61] : memref<9x256xf32, #tpu.memory_space<vmem>>, vector<1x256xf32>
    %85 = vector.broadcast %84 : vector<1x256xf32> to vector<8x256xf32>
    %86 = arith.mulf %83, %85 : vector<8x256xf32>
    %c56 = arith.constant 56 : index
    %c0_62 = arith.constant 0 : index
    %87 = vector.load %arg9[%c56, %c0_62] : memref<72x256xf32, #tpu.memory_space<vmem>>, vector<8x256xf32>
    tpu.vector_store %arg9[%c56, %c0_62], %86 {strides = array<i32>} : memref<72x256xf32, #tpu.memory_space<vmem>>, vector<8x256xf32>,
    %c239_i32_63 = arith.constant 239 : i32
    %88 = tpu.dynamic_rotate %51 by %c239_i32_63 dim 1 : vector<8x256xf32>, i32 -> vector<8x256xf32>
    %c8_64 = arith.constant 8 : index
    %c0_65 = arith.constant 0 : index
    %89 = vector.load %arg6[%c8_64, %c0_65] : memref<9x256xf32, #tpu.memory_space<vmem>>, vector<1x256xf32>
    %90 = vector.broadcast %89 : vector<1x256xf32> to vector<8x256xf32>
    %91 = arith.mulf %88, %90 : vector<8x256xf32>
    %c64 = arith.constant 64 : index
    %c0_66 = arith.constant 0 : index
    %92 = vector.load %arg9[%c64, %c0_66] : memref<72x256xf32, #tpu.memory_space<vmem>>, vector<8x256xf32>
    tpu.vector_store %arg9[%c64, %c0_66], %91 {strides = array<i32>} : memref<72x256xf32, #tpu.memory_space<vmem>>, vector<8x256xf32>,
    %c0_67 = arith.constant 0 : index
    %c0_68 = arith.constant 0 : index
    %93 = vector.load %arg4[%c0_67, %c0_68] : memref<8x72xbf16, #tpu.memory_space<vmem>>, vector<8x72xbf16>
    %c0_69 = arith.constant 0 : index
    %c0_70 = arith.constant 0 : index
    %94 = vector.load %arg9[%c0_69, %c0_70] : memref<72x256xf32, #tpu.memory_space<vmem>>, vector<72x256xf32>
    %95 = arith.truncf %94 : vector<72x256xf32> to vector<72x256xbf16>
    %cst_71 = arith.constant dense<0.000000e+00> : vector<8x256xf32>
    %96 = tpu.matmul %93, %95, %cst_71 {dimension_numbers = #tpu.dot_dimension_numbers<[1], [0], [0], [1], [0, 0, 1, 1], [], []>} : vector<8x72xbf16>, vector<72x256xbf16>, vector<8x256xf32> -> vector<8x256xf32>
    %c0_72 = arith.constant 0 : index
    %c0_73 = arith.constant 0 : index
    %97 = vector.load %arg5[%c0_72, %c0_73] : memref<8x1xf32, #tpu.memory_space<vmem>>, vector<8x1xf32>
    %98 = vector.broadcast %97 : vector<8x1xf32> to vector<8x256xf32>
    %99 = arith.addf %96, %98 : vector<8x256xf32>
    %cst_74 = arith.constant 0.000000e+00 : f32
    %100 = vector.broadcast %cst_74 : f32 to vector<8x256xf32>
    %101 = arith.maximumf %99, %100 : vector<8x256xf32>
    %c0_75 = arith.constant 0 : index
    %c0_76 = arith.constant 0 : index
    %c0_77 = arith.constant 0 : index
    %102 = vector.load %arg7[%c0_75, %c0_76, %c0_77] : memref<1x8x256xf32, #tpu.memory_space<vmem>>, vector<1x8x256xf32>
    %103 = vector.shape_cast %102 : vector<1x8x256xf32> to vector<8x256xf32>
    %104 = vector.shape_cast %101 : vector<8x256xf32> to vector<1x8x256xf32>
    tpu.vector_store %arg7[%c0_75, %c0_76, %c0_77], %104 {strides = array<i32>} : memref<1x8x256xf32, #tpu.memory_space<vmem>>, vector<1x8x256xf32>,
    return
  }
  func.func @transform_0(%arg0: i32) -> (i32, i32, i32) {
    %c0_i32 = arith.constant 0 : i32
    %c0_i32_0 = arith.constant 0 : i32
    %c0_i32_1 = arith.constant 0 : i32
    return %arg0, %c0_i32, %c0_i32_0 : i32, i32, i32
  }
  func.func @transform_1(%arg0: i32) -> (i32, i32) {
    %c0_i32 = arith.constant 0 : i32
    %c0_i32_0 = arith.constant 0 : i32
    %c0_i32_1 = arith.constant 0 : i32
    return %c0_i32, %c0_i32_0 : i32, i32
  }
  func.func @transform_2(%arg0: i32) -> (i32, i32) {
    %c0_i32 = arith.constant 0 : i32
    %c0_i32_0 = arith.constant 0 : i32
    %c0_i32_1 = arith.constant 0 : i32
    return %c0_i32, %c0_i32_0 : i32, i32
  }
  func.func @transform_3(%arg0: i32) -> (i32, i32) {
    %c0_i32 = arith.constant 0 : i32
    %c0_i32_0 = arith.constant 0 : i32
    %c0_i32_1 = arith.constant 0 : i32
    return %c0_i32, %c0_i32_0 : i32, i32
  }
  func.func @transform_4(%arg0: i32) -> (i32, i32) {
    %c0_i32 = arith.constant 0 : i32
    %c0_i32_0 = arith.constant 0 : i32
    %c0_i32_1 = arith.constant 0 : i32
    return %c0_i32, %c0_i32_0 : i32, i32
  }
  func.func @transform_5(%arg0: i32) -> (i32, i32) {
    %c0_i32 = arith.constant 0 : i32
    %c0_i32_0 = arith.constant 0 : i32
    %c0_i32_1 = arith.constant 0 : i32
    return %c0_i32, %c0_i32_0 : i32, i32
  }
  func.func @transform_6(%arg0: i32) -> (i32, i32, i32) {
    %c0_i32 = arith.constant 0 : i32
    %c0_i32_0 = arith.constant 0 : i32
    %c0_i32_1 = arith.constant 0 : i32
    return %arg0, %c0_i32, %c0_i32_0 : i32, i32, i32
  }
}

</mosaic_0001>

<llo_original>
// kernel: double_conv.1
$region0: #{double_conv.1}
  #allocation0 [shape = 'u32[]', space=smem, size = 0x4, offset = 0x4, fixed_abs, tag = 'smem constant byte address 0x4 - core index']
  #allocation1 [shape = 'u32[72,128]{1,0:T(1,128)}', space=vmem, size = 0x9000, scoped, tag = 'internal scratch']
  #allocation2 [shape = 'f32[36,256]{1,0:T(8,128)}', space=vmem, size = 0xa000, scoped, tag = 'scratch operand']
  #allocation3 [shape = 'f32[72,256]{1,0:T(8,128)}', space=vmem, size = 0x12000, scoped, tag = 'scratch operand']
  %s0 = inlined_call_operand.vmem [shape: f32[2,4,256], index: 0, kind: input, shape index: {}]
  %s1 = inlined_call_operand.vmem [shape: bf16[8,36], index: 1, kind: input, shape index: {}]
  %s2 = inlined_call_operand.vmem [shape: f32[8,1], index: 2, kind: input, shape index: {}]
  %s3 = inlined_call_operand.vmem [shape: bf16[8,72], index: 3, kind: input, shape index: {}]
  %s4 = inlined_call_operand.vmem [shape: f32[8,1], index: 4, kind: input, shape index: {}]
  %s5 = inlined_call_operand.vmem [shape: f32[9,256], index: 5, kind: input, shape index: {}]
  %s6 = inlined_call_operand.vmem [shape: f32[2,8,256], index: 6, kind: output, shape index: {}]
  %s7 = sld [smem:[#allocation0]]
  $region57: #{double_conv.1} parent=0
    _
  %s9 = ssub.s32 1, %s7
  %s10 = scalar_select 0, %s9, %s7
  loop: start=0, step=1, limit=4
  $region2: #{double_conv.1} parent=0 // loop_pre_header
    _
  $region3: #{double_conv.1} parent=0 // loop_header
    %s12 = sphi 0, %s16
    %p13 = scmp.ge.s32.totalorder %s12, 4
    %s22 = sphi 0, %s24
    %s25 = sphi 0, %s22
    %s26 = sphi 0, %s25
    %s42 = sphi 0, %s26
    %s46 = sphi 0, %s46
    %s48 = sphi 0, %s46
    %s49 = sphi 0, %s48
    %s63 = sphi 0, %s49
    %s67 = sphi 0, %s67
    %s69 = sphi 0, %s67
    %s70 = sphi 0, %s69
    %s84 = sphi 0, %s70
    %s88 = sphi 0, %s88
    %s90 = sphi 0, %s88
    %s91 = sphi 0, %s90
    %s105 = sphi 0, %s91
    %s109 = sphi 0, %s109
    %s111 = sphi 0, %s109
    %s112 = sphi 0, %s111
    %s126 = sphi 0, %s112
    %s130 = sphi 0, %s130
    %s132 = sphi 0, %s130
    %s133 = sphi 0, %s132
    %s147 = sphi 0, %s133
    %s153 = sphi 0, %s155
    %s156 = sphi 0, %s153
    %s157 = sphi 0, %s156
    %s173 = sphi 0, %s157
  $region4: #{double_conv.1} parent=0 // loop_header_branch
    %15 = sbr.rel (%p13) target = $region8
  $region5: #{double_conv.1} parent=0 // loop_body
    %s17 = ssub.s32 %s12, 1
    %s18 = ssub.s32 %s12, 2
    %s19 = sadd.s32 %s12, 1
    %s20 = ssub.s32 %s12, %s19
    %p21 = scmp.eq.s32.totalorder %s20, 0
    %s23 = sadd.s32 %s22, 1
    %s24 = scalar_select %p21, %s22, %s23
    %p27 = pneg %p21
    %p28 = scmp.eq.s32.totalorder %s12, 1
    %p29 = por %p27, %p28
    %p30 = scmp.ne.s32.totalorder %s22, %s25
    %p31 = scmp.eq.s32.totalorder %s12, 0
    %p32 = por %p30, %p31
    %p33 = scmp.ne.s32.totalorder %s22, %s25
    %p34 = scmp.eq.s32.totalorder %s17, 1
    %p35 = por %p33, %p34
    %p36 = scmp.ne.s32.totalorder %s25, %s26
    %p37 = scmp.eq.s32.totalorder %s17, 0
    %p38 = por %p36, %p37
    %p39 = scmp.ne.s32.totalorder %s25, %s26
    %p40 = scmp.eq.s32.totalorder %s18, 1
    %p41 = por %p39, %p40
    %p43 = scmp.ne.s32.totalorder %s26, %s42
    %p44 = scmp.eq.s32.totalorder %s18, 0
    %p45 = por %p43, %p44
    %s47 = sadd.s32 %s46, 1
    %p50 = scmp.eq.s32.totalorder %s12, 1
    %p51 = scmp.ne.s32.totalorder %s46, %s48
    %p52 = scmp.eq.s32.totalorder %s12, 0
    %p53 = por %p51, %p52
    %p54 = scmp.ne.s32.totalorder %s46, %s48
    %p55 = scmp.eq.s32.totalorder %s17, 1
    %p56 = por %p54, %p55
    %p57 = scmp.ne.s32.totalorder %s48, %s49
    %p58 = scmp.eq.s32.totalorder %s17, 0
    %p59 = por %p57, %p58
    %p60 = scmp.ne.s32.totalorder %s48, %s49
    %p61 = scmp.eq.s32.totalorder %s18, 1
    %p62 = por %p60, %p61
    %p64 = scmp.ne.s32.totalorder %s49, %s63
    %p65 = scmp.eq.s32.totalorder %s18, 0
    %p66 = por %p64, %p65
    %s68 = sadd.s32 %s67, 1
    %p71 = scmp.eq.s32.totalorder %s12, 1
    %p72 = scmp.ne.s32.totalorder %s67, %s69
    %p73 = scmp.eq.s32.totalorder %s12, 0
    %p74 = por %p72, %p73
    %p75 = scmp.ne.s32.totalorder %s67, %s69
    %p76 = scmp.eq.s32.totalorder %s17, 1
    %p77 = por %p75, %p76
    %p78 = scmp.ne.s32.totalorder %s69, %s70
    %p79 = scmp.eq.s32.totalorder %s17, 0
    %p80 = por %p78, %p79
    %p81 = scmp.ne.s32.totalorder %s69, %s70
    %p82 = scmp.eq.s32.totalorder %s18, 1
    %p83 = por %p81, %p82
    %p85 = scmp.ne.s32.totalorder %s70, %s84
    %p86 = scmp.eq.s32.totalorder %s18, 0
    %p87 = por %p85, %p86
    %s89 = sadd.s32 %s88, 1
    %p92 = scmp.eq.s32.totalorder %s12, 1
    %p93 = scmp.ne.s32.totalorder %s88, %s90
    %p94 = scmp.eq.s32.totalorder %s12, 0
    %p95 = por %p93, %p94
    %p96 = scmp.ne.s32.totalorder %s88, %s90
    %p97 = scmp.eq.s32.totalorder %s17, 1
    %p98 = por %p96, %p97
    %p99 = scmp.ne.s32.totalorder %s90, %s91
    %p100 = scmp.eq.s32.totalorder %s17, 0
    %p101 = por %p99, %p100
    %p102 = scmp.ne.s32.totalorder %s90, %s91
    %p103 = scmp.eq.s32.totalorder %s18, 1
    %p104 = por %p102, %p103
    %p106 = scmp.ne.s32.totalorder %s91, %s105
    %p107 = scmp.eq.s32.totalorder %s18, 0
    %p108 = por %p106, %p107
    %s110 = sadd.s32 %s109, 1
    %p113 = scmp.eq.s32.totalorder %s12, 1
    %p114 = scmp.ne.s32.totalorder %s109, %s111
    %p115 = scmp.eq.s32.totalorder %s12, 0
    %p116 = por %p114, %p115
    %p117 = scmp.ne.s32.totalorder %s109, %s111
    %p118 = scmp.eq.s32.totalorder %s17, 1
    %p119 = por %p117, %p118
    %p120 = scmp.ne.s32.totalorder %s111, %s112
    %p121 = scmp.eq.s32.totalorder %s17, 0
    %p122 = por %p120, %p121
    %p123 = scmp.ne.s32.totalorder %s111, %s112
    %p124 = scmp.eq.s32.totalorder %s18, 1
    %p125 = por %p123, %p124
    %p127 = scmp.ne.s32.totalorder %s112, %s126
    %p128 = scmp.eq.s32.totalorder %s18, 0
    %p129 = por %p127, %p128
    %s131 = sadd.s32 %s130, 1
    %p134 = scmp.eq.s32.totalorder %s12, 1
    %p135 = scmp.ne.s32.totalorder %s130, %s132
    %p136 = scmp.eq.s32.totalorder %s12, 0
    %p137 = por %p135, %p136
    %p138 = scmp.ne.s32.totalorder %s130, %s132
    %p139 = scmp.eq.s32.totalorder %s17, 1
    %p140 = por %p138, %p139
    %p141 = scmp.ne.s32.totalorder %s132, %s133
    %p142 = scmp.eq.s32.totalorder %s17, 0
    %p143 = por %p141, %p142
    %p144 = scmp.ne.s32.totalorder %s132, %s133
    %p145 = scmp.eq.s32.totalorder %s18, 1
    %p146 = por %p144, %p145
    %p148 = scmp.ne.s32.totalorder %s133, %s147
    %p149 = scmp.eq.s32.totalorder %s18, 0
    %p150 = por %p148, %p149
    %s151 = ssub.s32 %s12, %s19
    %p152 = scmp.eq.s32.totalorder %s151, 0
    %s154 = sadd.s32 %s153, 1
    %s155 = scalar_select %p152, %s153, %s154
    %p158 = pneg %p152
    %p159 = scmp.eq.s32.totalorder %s12, 1
    %p160 = por %p158, %p159
    %p161 = scmp.ne.s32.totalorder %s153, %s156
    %p162 = scmp.eq.s32.totalorder %s12, 0
    %p163 = por %p161, %p162
    %p164 = scmp.ne.s32.totalorder %s153, %s156
    %p165 = scmp.eq.s32.totalorder %s17, 1
    %p166 = por %p164, %p165
    %p167 = scmp.ne.s32.totalorder %s156, %s157
    %p168 = scmp.eq.s32.totalorder %s17, 0
    %p169 = por %p167, %p168
    %p170 = scmp.ne.s32.totalorder %s156, %s157
    %p171 = scmp.eq.s32.totalorder %s18, 1
    %p172 = por %p170, %p171
    %p174 = scmp.ne.s32.totalorder %s157, %s173
    %p175 = scmp.eq.s32.totalorder %s18, 0
    %p176 = por %p174, %p175
    %p177 = scmp.le.s32.totalorder 1, %s12
    %p178 = scmp.lt.s32.totalorder %s12, 3
    %p179 = pnand %p177, %p178
    %p180 = pneg %p179
    // Predicated region
    $region9: #{double_conv.1} parent=5 // pred_check
      _
    $region10: #{double_conv.1} parent=5 // pred_check_branch
      %182 = sbr.rel (%p179) target = $region12
    $region11: #{double_conv.1} parent=5 // pred_region
      %s183 = ssub.s32 %s12, 1
      // Predicated region
      $region13: #{double_conv.1} parent=11 // pred_check
        %p184 = pneg %p59
      $region14: #{double_conv.1} parent=11 // pred_check_branch
        %186 = sbr.rel (%p184) target = $region16
      $region15: #{double_conv.1} parent=11 // pred_region
        _
      $region16: #{double_conv.1} parent=11 // pred_fallthru
        _
      // Predicated region
      $region17: #{double_conv.1} parent=11 // pred_check
        %p187 = pneg %p80
      $region18: #{double_conv.1} parent=11 // pred_check_branch
        %189 = sbr.rel (%p187) target = $region20
      $region19: #{double_conv.1} parent=11 // pred_region
        _
      $region20: #{double_conv.1} parent=11 // pred_fallthru
        _
      // Predicated region
      $region21: #{double_conv.1} parent=11 // pred_check
        %p190 = pneg %p101
      $region22: #{double_conv.1} parent=11 // pred_check_branch
        %192 = sbr.rel (%p190) target = $region24
      $region23: #{double_conv.1} parent=11 // pred_region
        _
      $region24: #{double_conv.1} parent=11 // pred_fallthru
        _
      // Predicated region
      $region25: #{double_conv.1} parent=11 // pred_check
        %p193 = pneg %p122
      $region26: #{double_conv.1} parent=11 // pred_check_branch
        %195 = sbr.rel (%p193) target = $region28
      $region27: #{double_conv.1} parent=11 // pred_region
        _
      $region28: #{double_conv.1} parent=11 // pred_fallthru
        _
      // Predicated region
      $region29: #{double_conv.1} parent=11 // pred_check
        %p196 = pneg %p143
      $region30: #{double_conv.1} parent=11 // pred_check_branch
        %198 = sbr.rel (%p196) target = $region32
      $region31: #{double_conv.1} parent=11 // pred_region
        _
      $region32: #{double_conv.1} parent=11 // pred_fallthru
        _
    $region12: #{double_conv.1} parent=5 // pred_fallthru
      _
    %p199 = scmp.lt.s32.totalorder %s12, 2
    // Predicated region
    $region33: #{double_conv.1} parent=5 // pred_check
      %p200 = pneg %p199
    $region34: #{double_conv.1} parent=5 // pred_check_branch
      %202 = sbr.rel (%p200) target = $region36
    $region35: #{double_conv.1} parent=5 // pred_region
      // Predicated region
      $region37: #{double_conv.1} parent=35 // pred_check
        %p203 = pneg %p32
      $region38: #{double_conv.1} parent=35 // pred_check_branch
        %205 = sbr.rel (%p203) target = $region40
      $region39: #{double_conv.1} parent=35 // pred_region
        %p206 = scmp.lt.s32.totalorder %s12, 1
        %s207 = scalar_select %p206, %s12, 1
        %s208 = smul.addr %s207, 2
        %s209 = smul.addr %s208, 4
        %s210 = scalar_lea.vmem %s0, %s209
      $region40: #{double_conv.1} parent=35 // pred_fallthru
        _
    $region36: #{double_conv.1} parent=5 // pred_fallthru
      _
    %p211 = scmp.le.s32.totalorder 1, %s12
    %p212 = scmp.lt.s32.totalorder %s12, 3
    %p213 = pnand %p211, %p212
    %p214 = pneg %p213
    // Predicated region
    $region41: #{double_conv.1} parent=5 // pred_check
      _
    $region42: #{double_conv.1} parent=5 // pred_check_branch
      %216 = sbr.rel (%p213) target = $region44
    $region43: #{double_conv.1} parent=5 // pred_region
      %s217 = ssub.s32 %s12, 1
      %p218 = scmp.lt.s32.totalorder %s17, 1
      %s219 = scalar_select %p218, %s17, 1
      %s220 = smul.addr %s219, 2
      %s221 = smul.addr %s220, 4
      %s222 = scalar_lea.vmem %s0, %s221
      %p223 = pneg %p38
      %p224 = pneg %p35
      %p225 = pneg %p59
      %p226 = pneg %p56
      %p227 = pneg %p80
      %p228 = pneg %p77
      %p229 = pneg %p101
      %p230 = pneg %p98
      %p231 = pneg %p122
      %p232 = pneg %p119
      %p233 = pneg %p143
      %p234 = pneg %p140
      %p235 = pneg %p169
      %p236 = pneg %p166
      %p237 = scmp.lt.s32.totalorder %s17, 1
      %s238 = scalar_select %p237, %s17, 1
      %s239 = smul.addr %s238, 2
      %s240 = smul.addr %s239, 8
      %s241 = scalar_lea.vmem %s6, %s240
      %p242 = scmp.lt.s32.totalorder %s17, 1
      %s243 = scalar_select %p242, %s17, 1
      %s244 = smul.addr %s243, 2
      %s245 = smul.addr %s244, 4
      %s246 = scalar_lea.vmem %s0, %s245
      %p247 = scmp.lt.s32.totalorder %s17, 1
      %s248 = scalar_select %p247, %s17, 1
      %s249 = smul.addr %s248, 2
      %s250 = smul.addr %s249, 8
      %s251 = scalar_lea.vmem %s6, %s250
      %v253 = vld [vmem:[%s246] sm:$0xff]
      %255 = vst [vmem:[#allocation1] ss:$2 sm:$0xff] %v253
      %v256 = vld.sshfl [vmem:[#allocation1] sm:$0xff pattern:$0x75316420]
      %v257 = vld.sshfl [vmem:[#allocation1 + $0x8] sm:$0xff pattern:$0x75316420]
      %260 = vrot.lane.b32.xlu0 %v256, 17
      %v261 = vpop.permute.xlu0 %260
      %262 = vrot.lane.b32.xlu0 %v257, 17
      %v263 = vpop.permute.xlu0 %262
      %v264 = vlaneseq
      %v265 = vand.u32 %v264, 127
      %vm266 = vcmp.lt.s32.totalorder %v265, 17
      %v267 = vsel %vm266, %v261, %v263
      %v268 = vsel %vm266, %v263, %v261
      %v269 = vld [vmem:[%s5] ss:$8 sm:$0x3]
      %v271 = vperm.slane %v269, 0
      %v272 = vperm.slane %v269, 1
      %v275 = vmul.f32 %v268, %v271
      %v276 = vmul.f32 %v267, %v272
      %277 = vst [vmem:[#allocation2] sm:$0xf] %v275
      %278 = vst [vmem:[#allocation2 + $0x8] sm:$0xf] %v276
      %279 = vst [vmem:[#allocation1] ss:$2 sm:$0xff] %v253
      %v280 = vld.sshfl [vmem:[#allocation1] sm:$0xff pattern:$0x75316420]
      %v281 = vld.sshfl [vmem:[#allocation1 + $0x8] sm:$0xff pattern:$0x75316420]
      %284 = vrot.lane.b32.xlu0 %v280, 16
      %v285 = vpop.permute.xlu0 %284
      %286 = vrot.lane.b32.xlu0 %v281, 16
      %v287 = vpop.permute.xlu0 %286
      %vm288 = vcmp.lt.s32.totalorder %v265, 16
      %v289 = vsel %vm288, %v285, %v287
      %v290 = vsel %vm288, %v287, %v285
      %s291 = scalar_lea.vmem %s5, 1
      %v292 = vld [vmem:[%s291] ss:$8 sm:$0x3]
      %v294 = vperm.slane %v292, 0
      %v295 = vperm.slane %v292, 1
      %v298 = vmul.f32 %v290, %v294
      %v299 = vmul.f32 %v289, %v295
      %v302 = vrot.slane %v298, 4
      %v303 = vrot.slane %v299, 4
      %306 = vst [vmem:[#allocation2] sm:$0xf0] %v302
      %307 = vst [vmem:[#allocation2 + $0x8] sm:$0xf0] %v303
      %308 = vst [vmem:[#allocation1] ss:$2 sm:$0xff] %v253
      %v309 = vld.sshfl [vmem:[#allocation1] sm:$0xff pattern:$0x75316420]
      %v310 = vld.sshfl [vmem:[#allocation1 + $0x8] sm:$0xff pattern:$0x75316420]
      %313 = vrot.lane.b32.xlu0 %v309, 15
      %v314 = vpop.permute.xlu0 %313
      %315 = vrot.lane.b32.xlu0 %v310, 15
      %v316 = vpop.permute.xlu0 %315
      %vm317 = vcmp.lt.s32.totalorder %v265, 15
      %v318 = vsel %vm317, %v314, %v316
      %v319 = vsel %vm317, %v316, %v314
      %s320 = scalar_lea.vmem %s5, 2
      %v321 = vld [vmem:[%s320] ss:$8 sm:$0x3]
      %v323 = vperm.slane %v321, 0
      %v324 = vperm.slane %v321, 1
      %v327 = vmul.f32 %v319, %v323
      %v328 = vmul.f32 %v318, %v324
      %329 = vst [vmem:[#allocation2 + $0x10] sm:$0xf] %v327
      %330 = vst [vmem:[#allocation2 + $0x18] sm:$0xf] %v328
      %331 = vst [vmem:[#allocation1] ss:$2 sm:$0xff] %v253
      %v332 = vld.sshfl [vmem:[#allocation1] sm:$0xff pattern:$0x75316420]
      %v333 = vld.sshfl [vmem:[#allocation1 + $0x8] sm:$0xff pattern:$0x75316420]
      %336 = vrot.lane.b32.xlu0 %v332, 1
      %v337 = vpop.permute.xlu0 %336
      %338 = vrot.lane.b32.xlu0 %v333, 1
      %v339 = vpop.permute.xlu0 %338
      %vm340 = vcmp.lt.s32.totalorder %v265, 1
      %v341 = vsel %vm340, %v337, %v339
      %v342 = vsel %vm340, %v339, %v337
      %s343 = scalar_lea.vmem %s5, 3
      %v344 = vld [vmem:[%s343] ss:$8 sm:$0x3]
      %v346 = vperm.slane %v344, 0
      %v347 = vperm.slane %v344, 1
      %v350 = vmul.f32 %v342, %v346
      %v351 = vmul.f32 %v341, %v347
      %v354 = vrot.slane %v350, 4
      %v355 = vrot.slane %v351, 4
      %358 = vst [vmem:[#allocation2 + $0x10] sm:$0xf0] %v354
      %359 = vst [vmem:[#allocation2 + $0x18] sm:$0xf0] %v355
      %360 = vst [vmem:[#allocation1] ss:$2 sm:$0xff] %v253
      %v361 = vld.sshfl [vmem:[#allocation1] sm:$0xff pattern:$0x75316420]
      %v362 = vld.sshfl [vmem:[#allocation1 + $0x8] sm:$0xff pattern:$0x75316420]
      %365 = vst [vmem:[#allocation2 + $0x20] sm:$0xf] %v361
      %366 = vst [vmem:[#allocation2 + $0x28] sm:$0xf] %v362
      %367 = vst [vmem:[#allocation1] ss:$2 sm:$0xff] %v253
      %v368 = vld.sshfl [vmem:[#allocation1] sm:$0xff pattern:$0x75316420]
      %v369 = vld.sshfl [vmem:[#allocation1 + $0x8] sm:$0xff pattern:$0x75316420]
      %372 = vrot.lane.b32.xlu0 %v368, 127
      %v373 = vpop.permute.xlu0 %372
      %374 = vrot.lane.b32.xlu0 %v369, 127
      %v375 = vpop.permute.xlu0 %374
      %vm376 = vcmp.lt.s32.totalorder %v265, 127
      %v377 = vsel %vm376, %v373, %v375
      %v378 = vsel %vm376, %v375, %v373
      %s379 = scalar_lea.vmem %s5, 5
      %v380 = vld [vmem:[%s379] ss:$8 sm:$0x3]
      %v382 = vperm.slane %v380, 0
      %v383 = vperm.slane %v380, 1
      %v386 = vmul.f32 %v377, %v382
      %v387 = vmul.f32 %v378, %v383
      %v390 = vrot.slane %v386, 4
      %v391 = vrot.slane %v387, 4
      %394 = vst [vmem:[#allocation2 + $0x20] sm:$0xf0] %v390
      %395 = vst [vmem:[#allocation2 + $0x28] sm:$0xf0] %v391
      %396 = vst [vmem:[#allocation1] ss:$2 sm:$0xff] %v253
      %v397 = vld.sshfl [vmem:[#allocation1] sm:$0xff pattern:$0x75316420]
      %v398 = vld.sshfl [vmem:[#allocation1 + $0x8] sm:$0xff pattern:$0x75316420]
      %401 = vrot.lane.b32.xlu0 %v397, 113
      %v402 = vpop.permute.xlu0 %401
      %403 = vrot.lane.b32.xlu0 %v398, 113
      %v404 = vpop.permute.xlu0 %403
      %vm405 = vcmp.lt.s32.totalorder %v265, 113
      %v406 = vsel %vm405, %v402, %v404
      %v407 = vsel %vm405, %v404, %v402
      %s408 = scalar_lea.vmem %s5, 6
      %v409 = vld [vmem:[%s408] ss:$8 sm:$0x3]
      %v411 = vperm.slane %v409, 0
      %v412 = vperm.slane %v409, 1
      %v415 = vmul.f32 %v406, %v411
      %v416 = vmul.f32 %v407, %v412
      %417 = vst [vmem:[#allocation2 + $0x30] sm:$0xf] %v415
      %418 = vst [vmem:[#allocation2 + $0x38] sm:$0xf] %v416
      %419 = vst [vmem:[#allocation1] ss:$2 sm:$0xff] %v253
      %v420 = vld.sshfl [vmem:[#allocation1] sm:$0xff pattern:$0x75316420]
      %v421 = vld.sshfl [vmem:[#allocation1 + $0x8] sm:$0xff pattern:$0x75316420]
      %424 = vrot.lane.b32.xlu0 %v420, 112
      %v425 = vpop.permute.xlu0 %424
      %426 = vrot.lane.b32.xlu0 %v421, 112
      %v427 = vpop.permute.xlu0 %426
      %vm428 = vcmp.lt.s32.totalorder %v265, 112
      %v429 = vsel %vm428, %v425, %v427
      %v430 = vsel %vm428, %v427, %v425
      %s431 = scalar_lea.vmem %s5, 7
      %v432 = vld [vmem:[%s431] ss:$8 sm:$0x3]
      %v434 = vperm.slane %v432, 0
      %v435 = vperm.slane %v432, 1
      %v438 = vmul.f32 %v429, %v434
      %v439 = vmul.f32 %v430, %v435
      %v442 = vrot.slane %v438, 4
      %v443 = vrot.slane %v439, 4
      %446 = vst [vmem:[#allocation2 + $0x30] sm:$0xf0] %v442
      %447 = vst [vmem:[#allocation2 + $0x38] sm:$0xf0] %v443
      %448 = vst [vmem:[#allocation1] ss:$2 sm:$0xff] %v253
      %v449 = vld.sshfl [vmem:[#allocation1] sm:$0xff pattern:$0x75316420]
      %v450 = vld.sshfl [vmem:[#allocation1 + $0x8] sm:$0xff pattern:$0x75316420]
      %453 = vrot.lane.b32.xlu0 %v449, 111
      %v454 = vpop.permute.xlu0 %453
      %455 = vrot.lane.b32.xlu0 %v450, 111
      %v456 = vpop.permute.xlu0 %455
      %vm457 = vcmp.lt.s32.totalorder %v265, 111
      %v458 = vsel %vm457, %v454, %v456
      %v459 = vsel %vm457, %v456, %v454
      %s460 = scalar_lea.vmem %s5, 16
      %v461 = vld [vmem:[%s460] ss:$8 sm:$0x3]
      %v463 = vperm.slane %v461, 0
      %v464 = vperm.slane %v461, 1
      %v467 = vmul.f32 %v458, %v463
      %v468 = vmul.f32 %v459, %v464
      %469 = vst [vmem:[#allocation2 + $0x40] sm:$0xf] %v467
      %470 = vst [vmem:[#allocation2 + $0x48] sm:$0xf] %v468
      %v471 = vld [vmem:[%s1] sm:$0xf]
      %v472 = vld [vmem:[#allocation2] sm:$0xff]
      %v473 = vld [vmem:[#allocation2 + $0x8] sm:$0xff]
      %v474 = vld [vmem:[#allocation2 + $0x10] sm:$0xff]
      %v475 = vld [vmem:[#allocation2 + $0x18] sm:$0xff]
      %v476 = vld [vmem:[#allocation2 + $0x20] sm:$0xff]
      %v477 = vld [vmem:[#allocation2 + $0x28] sm:$0xff]
      %v478 = vld [vmem:[#allocation2 + $0x30] sm:$0xff]
      %v479 = vld [vmem:[#allocation2 + $0x38] sm:$0xff]
      %v480 = vld [vmem:[#allocation2 + $0x40] sm:$0xf]
      %v481 = vld [vmem:[#allocation2 + $0x48] sm:$0xf]
      %v482 = vpack.c.bf16 %v474, %v472
      %v483 = vpack.c.bf16 %v475, %v473
      %v484 = vpack.c.bf16 %v478, %v476
      %v485 = vpack.c.bf16 %v479, %v477
      %v486 = vpack.c.bf16 %v480, %v480
      %v487 = vpack.c.bf16 %v481, %v481
      %v488 = vld [vmem:[%s2] sm:$0xff]
      %490 = vset.pattern.permute.xlu0 0
      %491 = vperm.xlu0 %490, %v488
      %v492 = vpop.permute.xlu0 %491
      %vm494 = vcmask 293888
      %v496 = vsel %vm494, %v471, 0
      %vm498 = vcmask 1041408
      %v500 = vsel %vm498, %v486, 0
      %v503 = vsel %vm498, %v487, 0
      %505 = vmatpush.bf16.msra.mxu0 0
      %506 = vmatpush.bf16.msra.mxu0 0
      %507 = vmatpush.bf16.msra.mxu0 0
      %508 = vmatpush.bf16.msra.mxu0 0
      %509 = vmatpush.bf16.msra.mxu0 0
      %510 = vmatpush.bf16.msra.mxu0 %v500
      %511 = vmatpush.bf16.msra.mxu0 %v484
      %512 = vmatpush.bf16.msra.mxu0 %v482
      %513 = vmatmul.bf16.gmra.mxu0 %v496
      %v514 = vpop.f32.mrf.mxu0
      %v515 = vadd.f32 %v492, %v514
      %v516 = vpop.f32.mrf.mxu0
      %517 = vdwg.mxu0
      %518 = vmatpush.bf16.msra.mxu0 0
      %519 = vmatpush.bf16.msra.mxu0 0
      %520 = vmatpush.bf16.msra.mxu0 0
      %521 = vmatpush.bf16.msra.mxu0 0
      %522 = vmatpush.bf16.msra.mxu0 0
      %523 = vmatpush.bf16.msra.mxu0 %v503
      %524 = vmatpush.bf16.msra.mxu0 %v485
      %525 = vmatpush.bf16.msra.mxu0 %v483
      %526 = vmatmul.bf16.gmra.mxu0 %v496
      %v527 = vpop.f32.mrf.mxu0
      %v528 = vadd.f32 %v492, %v527
      %v529 = vpop.f32.mrf.mxu0
      %530 = vdwg.mxu0
      %v531 = vmax.f32 %v515, 0.0
      %v532 = vmax.f32 %v528, 0.0
      %533 = vrot.lane.b32.xlu0 %v531, 17
      %v534 = vpop.permute.xlu0 %533
      %535 = vrot.lane.b32.xlu0 %v532, 17
      %v536 = vpop.permute.xlu0 %535
      %v537 = vsel %vm266, %v534, %v536
      %v538 = vsel %vm266, %v536, %v534
      %v539 = vld [vmem:[%s5] ss:$8 sm:$0x3]
      %v541 = vperm.slane %v539, 0
      %v542 = vperm.slane %v539, 1
      %v545 = vmul.f32 %v538, %v541
      %v546 = vmul.f32 %v537, %v542
      %547 = vst [vmem:[#allocation3] sm:$0xff] %v545
      %548 = vst [vmem:[#allocation3 + $0x8] sm:$0xff] %v546
      %549 = vrot.lane.b32.xlu0 %v531, 16
      %v550 = vpop.permute.xlu0 %549
      %551 = vrot.lane.b32.xlu0 %v532, 16
      %v552 = vpop.permute.xlu0 %551
      %v553 = vsel %vm288, %v550, %v552
      %v554 = vsel %vm288, %v552, %v550
      %v555 = vld [vmem:[%s291] ss:$8 sm:$0x3]
      %v557 = vperm.slane %v555, 0
      %v558 = vperm.slane %v555, 1
      %v561 = vmul.f32 %v554, %v557
      %v562 = vmul.f32 %v553, %v558
      %563 = vst [vmem:[#allocation3 + $0x10] sm:$0xff] %v561
      %564 = vst [vmem:[#allocation3 + $0x18] sm:$0xff] %v562
      %565 = vrot.lane.b32.xlu0 %v531, 15
      %v566 = vpop.permute.xlu0 %565
      %567 = vrot.lane.b32.xlu0 %v532, 15
      %v568 = vpop.permute.xlu0 %567
      %v569 = vsel %vm317, %v566, %v568
      %v570 = vsel %vm317, %v568, %v566
      %v571 = vld [vmem:[%s320] ss:$8 sm:$0x3]
      %v573 = vperm.slane %v571, 0
      %v574 = vperm.slane %v571, 1
      %v577 = vmul.f32 %v570, %v573
      %v578 = vmul.f32 %v569, %v574
      %579 = vst [vmem:[#allocation3 + $0x20] sm:$0xff] %v577
      %580 = vst [vmem:[#allocation3 + $0x28] sm:$0xff] %v578
      %581 = vrot.lane.b32.xlu0 %v531, 1
      %v582 = vpop.permute.xlu0 %581
      %583 = vrot.lane.b32.xlu0 %v532, 1
      %v584 = vpop.permute.xlu0 %583
      %v585 = vsel %vm340, %v582, %v584
      %v586 = vsel %vm340, %v584, %v582
      %v587 = vld [vmem:[%s343] ss:$8 sm:$0x3]
      %v589 = vperm.slane %v587, 0
      %v590 = vperm.slane %v587, 1
      %v593 = vmul.f32 %v586, %v589
      %v594 = vmul.f32 %v585, %v590
      %595 = vst [vmem:[#allocation3 + $0x30] sm:$0xff] %v593
      %596 = vst [vmem:[#allocation3 + $0x38] sm:$0xff] %v594
      %597 = vst [vmem:[#allocation3 + $0x40] sm:$0xff] %v531
      %598 = vst [vmem:[#allocation3 + $0x48] sm:$0xff] %v532
      %599 = vrot.lane.b32.xlu0 %v531, 127
      %v600 = vpop.permute.xlu0 %599
      %601 = vrot.lane.b32.xlu0 %v532, 127
      %v602 = vpop.permute.xlu0 %601
      %v603 = vsel %vm376, %v600, %v602
      %v604 = vsel %vm376, %v602, %v600
      %v605 = vld [vmem:[%s379] ss:$8 sm:$0x3]
      %v607 = vperm.slane %v605, 0
      %v608 = vperm.slane %v605, 1
      %v611 = vmul.f32 %v603, %v607
      %v612 = vmul.f32 %v604, %v608
      %613 = vst [vmem:[#allocation3 + $0x50] sm:$0xff] %v611
      %614 = vst [vmem:[#allocation3 + $0x58] sm:$0xff] %v612
      %615 = vrot.lane.b32.xlu0 %v531, 113
      %v616 = vpop.permute.xlu0 %615
      %617 = vrot.lane.b32.xlu0 %v532, 113
      %v618 = vpop.permute.xlu0 %617
      %v619 = vsel %vm405, %v616, %v618
      %v620 = vsel %vm405, %v618, %v616
      %v621 = vld [vmem:[%s408] ss:$8 sm:$0x3]
      %v623 = vperm.slane %v621, 0
      %v624 = vperm.slane %v621, 1
      %v627 = vmul.f32 %v619, %v623
      %v628 = vmul.f32 %v620, %v624
      %629 = vst [vmem:[#allocation3 + $0x60] sm:$0xff] %v627
      %630 = vst [vmem:[#allocation3 + $0x68] sm:$0xff] %v628
      %631 = vrot.lane.b32.xlu0 %v531, 112
      %v632 = vpop.permute.xlu0 %631
      %633 = vrot.lane.b32.xlu0 %v532, 112
      %v634 = vpop.permute.xlu0 %633
      %v635 = vsel %vm428, %v632, %v634
      %v636 = vsel %vm428, %v634, %v632
      %v637 = vld [vmem:[%s431] ss:$8 sm:$0x3]
      %v639 = vperm.slane %v637, 0
      %v640 = vperm.slane %v637, 1
      %v643 = vmul.f32 %v635, %v639
      %v644 = vmul.f32 %v636, %v640
      %645 = vst [vmem:[#allocation3 + $0x70] sm:$0xff] %v643
      %646 = vst [vmem:[#allocation3 + $0x78] sm:$0xff] %v644
      %647 = vrot.lane.b32.xlu0 %v531, 111
      %v648 = vpop.permute.xlu0 %647
      %649 = vrot.lane.b32.xlu0 %v532, 111
      %v650 = vpop.permute.xlu0 %649
      %v651 = vsel %vm457, %v648, %v650
      %v652 = vsel %vm457, %v650, %v648
      %v653 = vld [vmem:[%s460] ss:$8 sm:$0x3]
      %v655 = vperm.slane %v653, 0
      %v656 = vperm.slane %v653, 1
      %v659 = vmul.f32 %v651, %v655
      %v660 = vmul.f32 %v652, %v656
      %661 = vst [vmem:[#allocation3 + $0x80] sm:$0xff] %v659
      %662 = vst [vmem:[#allocation3 + $0x88] sm:$0xff] %v660
      %v663 = vld [vmem:[%s3] sm:$0xf]
      %v664 = vld [vmem:[#allocation3] sm:$0xff]
      %v665 = vld [vmem:[#allocation3 + $0x8] sm:$0xff]
      %v666 = vld [vmem:[#allocation3 + $0x10] sm:$0xff]
      %v667 = vld [vmem:[#allocation3 + $0x18] sm:$0xff]
      %v668 = vld [vmem:[#allocation3 + $0x20] sm:$0xff]
      %v669 = vld [vmem:[#allocation3 + $0x28] sm:$0xff]
      %v670 = vld [vmem:[#allocation3 + $0x30] sm:$0xff]
      %v671 = vld [vmem:[#allocation3 + $0x38] sm:$0xff]
      %v672 = vld [vmem:[#allocation3 + $0x40] sm:$0xff]
      %v673 = vld [vmem:[#allocation3 + $0x48] sm:$0xff]
      %v674 = vld [vmem:[#allocation3 + $0x50] sm:$0xff]
      %v675 = vld [vmem:[#allocation3 + $0x58] sm:$0xff]
      %v676 = vld [vmem:[#allocation3 + $0x60] sm:$0xff]
      %v677 = vld [vmem:[#allocation3 + $0x68] sm:$0xff]
      %v678 = vld [vmem:[#allocation3 + $0x70] sm:$0xff]
      %v679 = vld [vmem:[#allocation3 + $0x78] sm:$0xff]
      %v680 = vld [vmem:[#allocation3 + $0x80] sm:$0xff]
      %v681 = vld [vmem:[#allocation3 + $0x88] sm:$0xff]
      %v682 = vpack.c.bf16 %v666, %v664
      %v683 = vpack.c.bf16 %v667, %v665
      %v684 = vpack.c.bf16 %v670, %v668
      %v685 = vpack.c.bf16 %v671, %v669
      %v686 = vpack.c.bf16 %v674, %v672
      %v687 = vpack.c.bf16 %v675, %v673
      %v688 = vpack.c.bf16 %v678, %v676
      %v689 = vpack.c.bf16 %v679, %v677
      %v690 = vpack.c.bf16 %v680, %v680
      %v691 = vpack.c.bf16 %v681, %v681
      %v692 = vld [vmem:[%s4] sm:$0xff]
      %694 = vset.pattern.permute.xlu0 0
      %695 = vperm.xlu0 %694, %v692
      %v696 = vpop.permute.xlu0 %695
      %vm698 = vcmask 588800
      %v700 = vsel %vm698, %v663, 0
      %vm702 = vcmask 1043456
      %v704 = vsel %vm702, %v690, 0
      %v707 = vsel %vm702, %v691, 0
      %709 = vmatpush.bf16.msra.mxu0 0
      %710 = vmatpush.bf16.msra.mxu0 0
      %711 = vmatpush.bf16.msra.mxu0 0
      %712 = vmatpush.bf16.msra.mxu0 %v704
      %713 = vmatpush.bf16.msra.mxu0 %v688
      %714 = vmatpush.bf16.msra.mxu0 %v686
      %715 = vmatpush.bf16.msra.mxu0 %v684
      %716 = vmatpush.bf16.msra.mxu0 %v682
      %717 = vmatmul.bf16.gmra.mxu0 %v700
      %v718 = vpop.f32.mrf.mxu0
      %v719 = vadd.f32 %v696, %v718
      %v720 = vpop.f32.mrf.mxu0
      %721 = vdwg.mxu0
      %722 = vmatpush.bf16.msra.mxu0 0
      %723 = vmatpush.bf16.msra.mxu0 0
      %724 = vmatpush.bf16.msra.mxu0 0
      %725 = vmatpush.bf16.msra.mxu0 %v707
      %726 = vmatpush.bf16.msra.mxu0 %v689
      %727 = vmatpush.bf16.msra.mxu0 %v687
      %728 = vmatpush.bf16.msra.mxu0 %v685
      %729 = vmatpush.bf16.msra.mxu0 %v683
      %730 = vmatmul.bf16.gmra.mxu0 %v700
      %v731 = vpop.f32.mrf.mxu0
      %v732 = vadd.f32 %v696, %v731
      %v733 = vpop.f32.mrf.mxu0
      %734 = vdwg.mxu0
      %v735 = vmax.f32 %v719, 0.0
      %v736 = vmax.f32 %v732, 0.0
      %737 = vst [vmem:[%s251] sm:$0xff] %v735
      %738 = vst [vmem:[%s251 + $0x8] sm:$0xff] %v736
      %p739 = scmp.lt.s32.totalorder %s17, 1
      %s740 = scalar_select %p739, %s17, 1
      %s741 = smul.addr %s740, 2
      %s742 = smul.addr %s741, 8
      %s743 = scalar_lea.vmem %s6, %s742
      // Predicated region
      $region45: #{double_conv.1} parent=43 // pred_check
        %p744 = pneg %p166
      $region46: #{double_conv.1} parent=43 // pred_check_branch
        %746 = sbr.rel (%p744) target = $region48
      $region47: #{double_conv.1} parent=43 // pred_region
        _
      $region48: #{double_conv.1} parent=43 // pred_fallthru
        _
    $region44: #{double_conv.1} parent=5 // pred_fallthru
      _
    %p747 = scmp.le.s32.totalorder 2, %s12
    // Predicated region
    $region49: #{double_conv.1} parent=5 // pred_check
      %p748 = pneg %p747
    $region50: #{double_conv.1} parent=5 // pred_check_branch
      %750 = sbr.rel (%p748) target = $region52
    $region51: #{double_conv.1} parent=5 // pred_region
      %s751 = ssub.s32 %s12, 2
      // Predicated region
      $region53: #{double_conv.1} parent=51 // pred_check
        %p752 = pneg %p172
      $region54: #{double_conv.1} parent=51 // pred_check_branch
        %754 = sbr.rel (%p752) target = $region56
      $region55: #{double_conv.1} parent=51 // pred_region
        %p755 = scmp.lt.s32.totalorder %s18, 1
        %s756 = scalar_select %p755, %s18, 1
        %s757 = smul.addr %s756, 2
        %s758 = smul.addr %s757, 8
        %s759 = scalar_lea.vmem %s6, %s758
      $region56: #{double_conv.1} parent=51 // pred_fallthru
        _
    $region52: #{double_conv.1} parent=5 // pred_fallthru
      _
  $region6: #{double_conv.1} parent=0 // loop_footer
    %s16 = sadd.s32 1, %s12
  $region7: #{double_conv.1} parent=0 // loop_footer_branch
    %11 = sbr.rel target = $region3
  $region8: #{double_conv.1} parent=0 // loop_exit
    _

</llo_original>
